<compile_context>
chip_gen: v7x
topology: tpu7x:2x2x1
jax: 0.10.0
libtpu: 0.0.40
codegen_flags: <defaults>
</compile_context>

<pallas_src>
import functools

import jax
import jax.numpy as jnp
from jax.experimental import pallas as pl
from jax.experimental.pallas import tpu as pltpu


def _round_up(n, m):
    return ((n + m - 1) // m) * m


def _vmem_limit_bytes():
    """~70% of physical VMEM for this generation; safe fallback of 32 MiB."""
    try:
        cap = pltpu.get_tpu_info().vmem_capacity_bytes
        return int(0.7 * cap)
    except Exception:
        return 32 * 1024 * 1024


def _mlp_fused_kernel(*refs, n_hidden, with_aux):
    # refs layout: x, (w0, b0), ..., (w_{L-1}, b_{L-1}), out[, aux]
    # w_i: [in_p, out_p] (pre-transposed, bf16), b_i: [1, out_p] (f32)
    x_ref = refs[0]
    param_refs = refs[1:1 + 2 * (n_hidden + 1)]
    if with_aux:
        out_ref, aux_ref = refs[-2], refs[-1]
    else:
        out_ref, aux_ref = refs[-1], None

    h = x_ref[...].astype(jnp.float32)
    for li in range(n_hidden):
        w = param_refs[2 * li][...]                     # bf16 [in_p, out_p]
        b = param_refs[2 * li + 1][...]                 # f32  [1, out_p]
        h = jnp.dot(h.astype(w.dtype), w,               # MXU, bf16 operands
                    preferred_element_type=jnp.float32) + b
        h = jax.nn.sigmoid(h)                           # EUP slot, f32
    if with_aux:
        aux_ref[...] = h.astype(aux_ref.dtype)

    w = param_refs[2 * n_hidden][...]
    b = param_refs[2 * n_hidden + 1][...]
    out = jnp.dot(h.astype(w.dtype), w, preferred_element_type=jnp.float32) + b
    out_ref[...] = out.astype(out_ref.dtype)


class MLPPallas:
    """Mirror of the PyTorch MLP: hidden Linear+Sigmoid layers, then fc_out.
    forward(x) -> (out, aux) where aux is the last hidden activation."""

    def __init__(self, in_dim, out_dim, hidden_dims=(100,), key=None,
                 dtype=jnp.float32, param_dtype=jnp.bfloat16):
        if key is None:
            key = jax.random.PRNGKey(0)
        dims = [in_dim] + list(hidden_dims) + [out_dim]
        self.dims = dims
        self.dtype = dtype
        self.param_dtype = param_dtype

        # Original (unpadded) params in PyTorch nn.Linear layout W: [out, in].
        self.weights = []
        self.biases = []
        for fan_in, fan_out in zip(dims[:-1], dims[1:]):
            key, kw, kb = jax.random.split(key, 3)
            bound = 1.0 / (fan_in ** 0.5)
            w = jax.random.uniform(kw, (fan_out, fan_in), dtype, minval=-bound, maxval=bound)
            b = jax.random.uniform(kb, (fan_out,), dtype, minval=-bound, maxval=bound)
            self.weights.append(w)
            self.biases.append(b)

        # Kernel params: zero-padded to lane multiples of 128, pre-transposed
        # to [in_p, out_p] in param_dtype; bias as an f32 [1, out_p] row.
        self.dims_p = [_round_up(d, 128) for d in dims]
        self._kernel_params = []
        for li, (w, b) in enumerate(zip(self.weights, self.biases)):
            din_p, dout_p = self.dims_p[li], self.dims_p[li + 1]
            wt = (jnp.zeros((din_p, dout_p), jnp.float32)
                  .at[: w.shape[1], : w.shape[0]].set(w.T.astype(jnp.float32))
                  .astype(param_dtype))
            bp = jnp.zeros((1, dout_p), jnp.float32).at[0, : b.shape[0]].set(
                b.astype(jnp.float32))
            self._kernel_params.append((wt, bp))

    def _build_in_specs(self, TB, single_buffer_weights):
        dims_p = self.dims_p
        # Grid-invariant weights/biases: DMA'd once -> single buffer is enough.
        wkw = {"pipeline_mode": pl.Buffered(1)} if single_buffer_weights else {}
        in_specs = [pl.BlockSpec((TB, dims_p[0]), lambda i: (i, 0))]
        for li in range(len(dims_p) - 1):
            din_p, dout_p = dims_p[li], dims_p[li + 1]
            in_specs.append(pl.BlockSpec((din_p, dout_p), lambda i: (0, 0), **wkw))
            in_specs.append(pl.BlockSpec((1, dout_p), lambda i: (0, 0), **wkw))
        return in_specs

    def __call__(self, x, return_aux=True):
        B, Din = x.shape
        assert Din == self.dims[0]
        dims_p = self.dims_p
        n_hidden = len(self.dims) - 2

        # Batch tiling: pad to sublane multiple of 8; up to 512-row tiles
        # (better HBM roofline, fewer grid steps); when the batch allows,
        # emit >= 2 tiles so v7x's second TensorCore gets work.
        Bp = _round_up(B, 8)
        if Bp <= 8:
            TB = Bp
        else:
            TB = min(512, _round_up(pl.cdiv(Bp, 2), 8))
            Bp = _round_up(Bp, TB)
        x_p = jnp.zeros((Bp, dims_p[0]), x.dtype).at[:B, :Din].set(x)

        kernel = functools.partial(_mlp_fused_kernel, n_hidden=n_hidden,
                                   with_aux=return_aux)

        flat_params = []
        for wt, bp in self._kernel_params:
            flat_params += [wt, bp]

        out_p, aux_p = dims_p[-1], dims_p[-2]
        if return_aux:
            out_shape = (
                jax.ShapeDtypeStruct((Bp, out_p), x.dtype),
                jax.ShapeDtypeStruct((Bp, aux_p), x.dtype),
            )
            out_specs = (
                pl.BlockSpec((TB, out_p), lambda i: (i, 0)),
                pl.BlockSpec((TB, aux_p), lambda i: (i, 0)),
            )
        else:
            out_shape = jax.ShapeDtypeStruct((Bp, out_p), x.dtype)
            out_specs = pl.BlockSpec((TB, out_p), lambda i: (i, 0))

        # Advisory cost estimate (dtype-accurate byte counts).
        x_bytes = jnp.dtype(x.dtype).itemsize
        w_bytes = jnp.dtype(self.param_dtype).itemsize
        flops = sum(2 * Bp * dims_p[li] * dims_p[li + 1] for li in range(len(dims_p) - 1))
        transcendentals = sum(Bp * dims_p[li + 1] for li in range(n_hidden))
        bytes_accessed = (
            x_bytes * Bp * dims_p[0]
            + sum(w_bytes * dims_p[li] * dims_p[li + 1] + 4 * dims_p[li + 1]
                  for li in range(len(dims_p) - 1))
            + x_bytes * Bp * out_p
            + (x_bytes * Bp * aux_p if return_aux else 0)
        )

        compiler_params = pltpu.CompilerParams(
            dimension_semantics=("parallel",),        # shard batch tiles (v7x megacore)
            vmem_limit_bytes=_vmem_limit_bytes(),     # generation-aware budget
        )
        cost = pl.CostEstimate(flops=flops, transcendentals=transcendentals,
                               bytes_accessed=bytes_accessed)

        result = None
        last_err = None
        # Try single-buffered weights first; fall back to default buffering if
        # the backend rejects Buffered(1).
        for single_buffer in (True, False):
            try:
                result = pl.pallas_call(
                    kernel,
                    out_shape=out_shape,
                    grid=(Bp // TB,),
                    in_specs=self._build_in_specs(TB, single_buffer),
                    out_specs=out_specs,
                    compiler_params=compiler_params,
                    cost_estimate=cost,
                )(x_p, *flat_params)
                break
            except Exception as e:  # pragma: no cover - fallback path
                last_err = e
                result = None
        if result is None:
            raise last_err

        # Slice off lane/batch padding (see correctness notes at file top).
        if return_aux:
            out_pad, aux_pad = result
            out = out_pad[:B, : self.dims[-1]]
            aux = aux_pad[:B, : self.dims[-2]]
            return out, aux
        out_pad = result
        return out_pad[:B, : self.dims[-1]]


if __name__ == "__main__":
    key = jax.random.PRNGKey(0)
    k_x, k_p = jax.random.split(key)

    batch, in_dim, out_dim = 8, 16, 8
    hidden_dims = (32,)

    x = jax.random.normal(k_x, (batch, in_dim), dtype=jnp.float32)
    model = MLPPallas(in_dim, out_dim, hidden_dims=hidden_dims, key=k_p)

    out, aux = model(x)
    jax.block_until_ready((out, aux))

    # Reference check in plain JAX using the SAME bf16-quantized weights the
    # kernel sees (f32 bias, f32 accumulate) -> residual error comes only from
    # the in-kernel bf16 cast of activations.
    qweights = [w.astype(model.param_dtype).astype(jnp.float32) for w in model.weights]
    ref = x
    for w, b in zip(qweights[:-1], model.biases[:-1]):
        ref = jax.nn.sigmoid(ref @ w.T + b)
    ref_aux = ref
    ref_out = ref @ qweights[-1].T + model.biases[-1]

    assert out.shape == (batch, out_dim) and aux.shape == (batch, hidden_dims[-1])
    assert jnp.allclose(out, ref_out, atol=2e-2, rtol=2e-2), "out mismatch"
    assert jnp.allclose(aux, ref_aux, atol=2e-2, rtol=2e-2), "aux mismatch"

    print("KERNEL_OK")
</pallas_src>

<mosaic_0001>
module attributes {stable_mosaic.version = 11 : i64} {
  func.func @_mlp_fused_kernel(%arg0: i32, %arg1: memref<8x128xf32, #tpu.memory_space<vmem>>, %arg2: memref<128x128xbf16, #tpu.memory_space<vmem>>, %arg3: memref<1x128xf32, #tpu.memory_space<vmem>>, %arg4: memref<128x128xbf16, #tpu.memory_space<vmem>>, %arg5: memref<1x128xf32, #tpu.memory_space<vmem>>, %arg6: memref<8x128xf32, #tpu.memory_space<vmem>>, %arg7: memref<8x128xf32, #tpu.memory_space<vmem>>) attributes {dimension_semantics = [#tpu.dimension_semantics<parallel>], iteration_bounds = array<i64: 1>, scalar_prefetch = 0 : i64, scratch_operands = 0 : i64, tpu.core_type = #tpu.core_type<tc>, window_params = [{transform_indices = @transform_0, window_bounds = array<i64: 8, 128>}, {pipeline_mode = #tpu.pipeline_mode<synchronous>, transform_indices = @transform_1, window_bounds = array<i64: 128, 128>}, {pipeline_mode = #tpu.pipeline_mode<synchronous>, transform_indices = @transform_2, window_bounds = array<i64: 1, 128>}, {pipeline_mode = #tpu.pipeline_mode<synchronous>, transform_indices = @transform_3, window_bounds = array<i64: 128, 128>}, {pipeline_mode = #tpu.pipeline_mode<synchronous>, transform_indices = @transform_4, window_bounds = array<i64: 1, 128>}, {transform_indices = @transform_5, window_bounds = array<i64: 8, 128>}, {transform_indices = @transform_6, window_bounds = array<i64: 8, 128>}]} {
    %c0 = arith.constant 0 : index
    %c0_0 = arith.constant 0 : index
    %0 = vector.load %arg1[%c0, %c0_0] : memref<8x128xf32, #tpu.memory_space<vmem>>, vector<8x128xf32>
    %c0_1 = arith.constant 0 : index
    %c0_2 = arith.constant 0 : index
    %1 = vector.load %arg2[%c0_1, %c0_2] : memref<128x128xbf16, #tpu.memory_space<vmem>>, vector<128x128xbf16>
    %c0_3 = arith.constant 0 : index
    %c0_4 = arith.constant 0 : index
    %2 = vector.load %arg3[%c0_3, %c0_4] : memref<1x128xf32, #tpu.memory_space<vmem>>, vector<1x128xf32>
    %3 = arith.truncf %0 : vector<8x128xf32> to vector<8x128xbf16>
    %cst = arith.constant dense<0.000000e+00> : vector<8x128xf32>
    %4 = tpu.matmul %3, %1, %cst {dimension_numbers = #tpu.dot_dimension_numbers<[1], [0], [0], [1], [0, 0, 1, 1], [], []>} : vector<8x128xbf16>, vector<128x128xbf16>, vector<8x128xf32> -> vector<8x128xf32>
    %5 = vector.broadcast %2 : vector<1x128xf32> to vector<8x128xf32>
    %6 = arith.addf %4, %5 : vector<8x128xf32>
    %7 = arith.negf %6 : vector<8x128xf32>
    %8 = math.exp %7 : vector<8x128xf32>
    %cst_5 = arith.constant 1.000000e+00 : f32
    %9 = vector.broadcast %cst_5 : f32 to vector<8x128xf32>
    %10 = arith.addf %9, %8 : vector<8x128xf32>
    %11 = arith.divf %9, %10 : vector<8x128xf32>
    %c0_6 = arith.constant 0 : index
    %c0_7 = arith.constant 0 : index
    %12 = vector.load %arg7[%c0_6, %c0_7] : memref<8x128xf32, #tpu.memory_space<vmem>>, vector<8x128xf32>
    tpu.vector_store %arg7[%c0_6, %c0_7], %11 {strides = array<i32>} : memref<8x128xf32, #tpu.memory_space<vmem>>, vector<8x128xf32>,
    %c0_8 = arith.constant 0 : index
    %c0_9 = arith.constant 0 : index
    %13 = vector.load %arg4[%c0_8, %c0_9] : memref<128x128xbf16, #tpu.memory_space<vmem>>, vector<128x128xbf16>
    %c0_10 = arith.constant 0 : index
    %c0_11 = arith.constant 0 : index
    %14 = vector.load %arg5[%c0_10, %c0_11] : memref<1x128xf32, #tpu.memory_space<vmem>>, vector<1x128xf32>
    %15 = arith.truncf %11 : vector<8x128xf32> to vector<8x128xbf16>
    %cst_12 = arith.constant dense<0.000000e+00> : vector<8x128xf32>
    %16 = tpu.matmul %15, %13, %cst_12 {dimension_numbers = #tpu.dot_dimension_numbers<[1], [0], [0], [1], [0, 0, 1, 1], [], []>} : vector<8x128xbf16>, vector<128x128xbf16>, vector<8x128xf32> -> vector<8x128xf32>
    %17 = vector.broadcast %14 : vector<1x128xf32> to vector<8x128xf32>
    %18 = arith.addf %16, %17 : vector<8x128xf32>
    %c0_13 = arith.constant 0 : index
    %c0_14 = arith.constant 0 : index
    %19 = vector.load %arg6[%c0_13, %c0_14] : memref<8x128xf32, #tpu.memory_space<vmem>>, vector<8x128xf32>
    tpu.vector_store %arg6[%c0_13, %c0_14], %18 {strides = array<i32>} : memref<8x128xf32, #tpu.memory_space<vmem>>, vector<8x128xf32>,
    return
  }
  func.func @transform_0(%arg0: i32) -> (i32, i32) {
    %c0_i32 = arith.constant 0 : i32
    %c0_i32_0 = arith.constant 0 : i32
    return %arg0, %c0_i32 : i32, i32
  }
  func.func @transform_1(%arg0: i32) -> (i32, i32) {
    %c0_i32 = arith.constant 0 : i32
    %c0_i32_0 = arith.constant 0 : i32
    %c0_i32_1 = arith.constant 0 : i32
    return %c0_i32, %c0_i32_0 : i32, i32
  }
  func.func @transform_2(%arg0: i32) -> (i32, i32) {
    %c0_i32 = arith.constant 0 : i32
    %c0_i32_0 = arith.constant 0 : i32
    %c0_i32_1 = arith.constant 0 : i32
    return %c0_i32, %c0_i32_0 : i32, i32
  }
  func.func @transform_3(%arg0: i32) -> (i32, i32) {
    %c0_i32 = arith.constant 0 : i32
    %c0_i32_0 = arith.constant 0 : i32
    %c0_i32_1 = arith.constant 0 : i32
    return %c0_i32, %c0_i32_0 : i32, i32
  }
  func.func @transform_4(%arg0: i32) -> (i32, i32) {
    %c0_i32 = arith.constant 0 : i32
    %c0_i32_0 = arith.constant 0 : i32
    %c0_i32_1 = arith.constant 0 : i32
    return %c0_i32, %c0_i32_0 : i32, i32
  }
  func.func @transform_5(%arg0: i32) -> (i32, i32) {
    %c0_i32 = arith.constant 0 : i32
    %c0_i32_0 = arith.constant 0 : i32
    return %arg0, %c0_i32 : i32, i32
  }
  func.func @transform_6(%arg0: i32) -> (i32, i32) {
    %c0_i32 = arith.constant 0 : i32
    %c0_i32_0 = arith.constant 0 : i32
    return %arg0, %c0_i32 : i32, i32
  }
}

module attributes {stable_mosaic.version = 11 : i64} {
  func.func @_mlp_fused_kernel(%arg0: i32, %arg1: memref<8x128xf32, #tpu.memory_space<vmem>>, %arg2: memref<128x128xbf16, #tpu.memory_space<vmem>>, %arg3: memref<1x128xf32, #tpu.memory_space<vmem>>, %arg4: memref<128x128xbf16, #tpu.memory_space<vmem>>, %arg5: memref<1x128xf32, #tpu.memory_space<vmem>>, %arg6: memref<8x128xf32, #tpu.memory_space<vmem>>, %arg7: memref<8x128xf32, #tpu.memory_space<vmem>>) attributes {dimension_semantics = [#tpu.dimension_semantics<parallel>], iteration_bounds = array<i64: 1>, scalar_prefetch = 0 : i64, scratch_operands = 0 : i64, tpu.core_type = #tpu.core_type<tc>, window_params = [{transform_indices = @transform_0, window_bounds = array<i64: 8, 128>}, {pipeline_mode = #tpu.pipeline_mode<synchronous>, transform_indices = @transform_1, window_bounds = array<i64: 128, 128>}, {pipeline_mode = #tpu.pipeline_mode<synchronous>, transform_indices = @transform_2, window_bounds = array<i64: 1, 128>}, {pipeline_mode = #tpu.pipeline_mode<synchronous>, transform_indices = @transform_3, window_bounds = array<i64: 128, 128>}, {pipeline_mode = #tpu.pipeline_mode<synchronous>, transform_indices = @transform_4, window_bounds = array<i64: 1, 128>}, {transform_indices = @transform_5, window_bounds = array<i64: 8, 128>}, {transform_indices = @transform_6, window_bounds = array<i64: 8, 128>}]} {
    %c0 = arith.constant 0 : index
    %c0_0 = arith.constant 0 : index
    %0 = vector.load %arg1[%c0, %c0_0] : memref<8x128xf32, #tpu.memory_space<vmem>>, vector<8x128xf32>
    %c0_1 = arith.constant 0 : index
    %c0_2 = arith.constant 0 : index
    %1 = vector.load %arg2[%c0_1, %c0_2] : memref<128x128xbf16, #tpu.memory_space<vmem>>, vector<128x128xbf16>
    %c0_3 = arith.constant 0 : index
    %c0_4 = arith.constant 0 : index
    %2 = vector.load %arg3[%c0_3, %c0_4] : memref<1x128xf32, #tpu.memory_space<vmem>>, vector<1x128xf32>
    %3 = arith.truncf %0 : vector<8x128xf32> to vector<8x128xbf16>
    %cst = arith.constant dense<0.000000e+00> : vector<8x128xf32>
    %4 = tpu.matmul %3, %1, %cst {dimension_numbers = #tpu.dot_dimension_numbers<[1], [0], [0], [1], [0, 0, 1, 1], [], []>} : vector<8x128xbf16>, vector<128x128xbf16>, vector<8x128xf32> -> vector<8x128xf32>
    %5 = vector.broadcast %2 : vector<1x128xf32> to vector<8x128xf32>
    %6 = arith.addf %4, %5 : vector<8x128xf32>
    %7 = arith.negf %6 : vector<8x128xf32>
    %8 = math.exp %7 : vector<8x128xf32>
    %cst_5 = arith.constant 1.000000e+00 : f32
    %9 = vector.broadcast %cst_5 : f32 to vector<8x128xf32>
    %10 = arith.addf %9, %8 : vector<8x128xf32>
    %11 = arith.divf %9, %10 : vector<8x128xf32>
    %c0_6 = arith.constant 0 : index
    %c0_7 = arith.constant 0 : index
    %12 = vector.load %arg7[%c0_6, %c0_7] : memref<8x128xf32, #tpu.memory_space<vmem>>, vector<8x128xf32>
    tpu.vector_store %arg7[%c0_6, %c0_7], %11 {strides = array<i32>} : memref<8x128xf32, #tpu.memory_space<vmem>>, vector<8x128xf32>,
    %c0_8 = arith.constant 0 : index
    %c0_9 = arith.constant 0 : index
    %13 = vector.load %arg4[%c0_8, %c0_9] : memref<128x128xbf16, #tpu.memory_space<vmem>>, vector<128x128xbf16>
    %c0_10 = arith.constant 0 : index
    %c0_11 = arith.constant 0 : index
    %14 = vector.load %arg5[%c0_10, %c0_11] : memref<1x128xf32, #tpu.memory_space<vmem>>, vector<1x128xf32>
    %15 = arith.truncf %11 : vector<8x128xf32> to vector<8x128xbf16>
    %cst_12 = arith.constant dense<0.000000e+00> : vector<8x128xf32>
    %16 = tpu.matmul %15, %13, %cst_12 {dimension_numbers = #tpu.dot_dimension_numbers<[1], [0], [0], [1], [0, 0, 1, 1], [], []>} : vector<8x128xbf16>, vector<128x128xbf16>, vector<8x128xf32> -> vector<8x128xf32>
    %17 = vector.broadcast %14 : vector<1x128xf32> to vector<8x128xf32>
    %18 = arith.addf %16, %17 : vector<8x128xf32>
    %c0_13 = arith.constant 0 : index
    %c0_14 = arith.constant 0 : index
    %19 = vector.load %arg6[%c0_13, %c0_14] : memref<8x128xf32, #tpu.memory_space<vmem>>, vector<8x128xf32>
    tpu.vector_store %arg6[%c0_13, %c0_14], %18 {strides = array<i32>} : memref<8x128xf32, #tpu.memory_space<vmem>>, vector<8x128xf32>,
    return
  }
  func.func @transform_0(%arg0: i32) -> (i32, i32) {
    %c0_i32 = arith.constant 0 : i32
    %c0_i32_0 = arith.constant 0 : i32
    return %arg0, %c0_i32 : i32, i32
  }
  func.func @transform_1(%arg0: i32) -> (i32, i32) {
    %c0_i32 = arith.constant 0 : i32
    %c0_i32_0 = arith.constant 0 : i32
    %c0_i32_1 = arith.constant 0 : i32
    return %c0_i32, %c0_i32_0 : i32, i32
  }
  func.func @transform_2(%arg0: i32) -> (i32, i32) {
    %c0_i32 = arith.constant 0 : i32
    %c0_i32_0 = arith.constant 0 : i32
    %c0_i32_1 = arith.constant 0 : i32
    return %c0_i32, %c0_i32_0 : i32, i32
  }
  func.func @transform_3(%arg0: i32) -> (i32, i32) {
    %c0_i32 = arith.constant 0 : i32
    %c0_i32_0 = arith.constant 0 : i32
    %c0_i32_1 = arith.constant 0 : i32
    return %c0_i32, %c0_i32_0 : i32, i32
  }
  func.func @transform_4(%arg0: i32) -> (i32, i32) {
    %c0_i32 = arith.constant 0 : i32
    %c0_i32_0 = arith.constant 0 : i32
    %c0_i32_1 = arith.constant 0 : i32
    return %c0_i32, %c0_i32_0 : i32, i32
  }
  func.func @transform_5(%arg0: i32) -> (i32, i32) {
    %c0_i32 = arith.constant 0 : i32
    %c0_i32_0 = arith.constant 0 : i32
    return %arg0, %c0_i32 : i32, i32
  }
  func.func @transform_6(%arg0: i32) -> (i32, i32) {
    %c0_i32 = arith.constant 0 : i32
    %c0_i32_0 = arith.constant 0 : i32
    return %arg0, %c0_i32 : i32, i32
  }
}

</mosaic_0001>

<llo_original>
// kernel: tpu_custom_call.1
$region0: #{tpu_custom_call.1}
  #allocation0 [shape = 'u32[]', space=smem, size = 0x4, offset = 0x4, fixed_abs, tag = 'smem constant byte address 0x4 - core index']
  #allocation1 [shape = 'u32[144,128]{1,0:T(1,128)}', space=vmem, size = 0x12000, scoped, tag = 'internal scratch']
  %s0 = inlined_call_operand.hbm [shape: f32[8,128], index: 0, kind: input, shape index: {}]
  %s1 = inlined_call_operand.hbm [shape: bf16[128,128], index: 1, kind: input, shape index: {}]
  %s2 = inlined_call_operand.vmem [shape: f32[1,128], index: 2, kind: input, shape index: {}]
  %s3 = inlined_call_operand.hbm [shape: bf16[128,128], index: 3, kind: input, shape index: {}]
  %s4 = inlined_call_operand.vmem [shape: f32[1,128], index: 4, kind: input, shape index: {}]
  %s5 = inlined_call_operand.hbm [shape: f32[8,128], index: 5, kind: output, shape index: {0}]
  %s6 = inlined_call_operand.hbm [shape: f32[8,128], index: 6, kind: output, shape index: {1}]
  %7 = xla_tuple %s5, %s6
  %s8 = sld [smem:[#allocation0]]
  $region50: #{tpu_custom_call.1} parent=0
    _
  %s10 = ssub.s32 1, %s8
  %s11 = scalar_select 0, %s10, %s8
  $region1: #{tpu_custom_call.1} parent=0
    #allocation2 [shape = 'u8[4096]{0}', space=vmem, size = 0x1000, scoped, tag = 'input window, operand 0, single buffered']
    #allocation3 [shape = 's32[1]{0}', space=sflag, size = 0x4, scoped, tag = 'scoped memory for tpu_custom_call.1']
    #allocation4 [shape = 's32[1]{0}', space=sflag, size = 0x4, scoped, tag = 'scoped memory for tpu_custom_call.1']
    #allocation5 [shape = 'u8[32768]{0}', space=vmem, size = 0x8000, scoped, tag = 'input window, operand 1, single buffered']
    #allocation6 [shape = 's32[1]{0}', space=sflag, size = 0x4, scoped, tag = 'scoped memory for tpu_custom_call.1']
    #allocation7 [shape = 'u8[32768]{0}', space=vmem, size = 0x8000, scoped, tag = 'input window, operand 3, single buffered']
    #allocation8 [shape = 'u8[4096]{0}', space=vmem, size = 0x1000, scoped, tag = 'output window, operand 0, single buffered']
    #allocation9 [shape = 'u8[4096]{0}', space=vmem, size = 0x1000, scoped, tag = 'output window, operand 1, single buffered']
    #allocation10 [shape = 's32[1]{0}', space=sflag, size = 0x4, scoped, tag = 'scoped memory for tpu_custom_call.1']
    %12 = vsyncpa [#allocation3], 0
    %13 = vsyncpa [#allocation6], 0
    %14 = vsyncpa [#allocation4], 0
    %15 = vsyncpa [#allocation10], 0
    // Predicated region
    $region2: #{tpu_custom_call.1} parent=1 // pred_check
      _
    $region3: #{tpu_custom_call.1} parent=1 // pred_check_branch
      %17 = sbr.rel (0) target = $region5
    $region4: #{tpu_custom_call.1} parent=1 // pred_region
      %s19 = ssub.s32 128, 128
      %20 = vsyncadd [#allocation3], %s19
      %s22 = sshll.u32 [#allocation2], 4
      %s23 = int_to_ptr.vmem [resolvable:$true] %s22
      %25 = dma.hbm_to_vmem [thread:$0]  %s0, 128, %s23, [#allocation3]
    $region5: #{tpu_custom_call.1} parent=1 // pred_fallthru
      _
    // Predicated region
    $region6: #{tpu_custom_call.1} parent=1 // pred_check
      _
    $region7: #{tpu_custom_call.1} parent=1 // pred_check_branch
      %27 = sbr.rel (0) target = $region9
    $region8: #{tpu_custom_call.1} parent=1 // pred_region
      %s29 = ssub.s32 1024, 1024
      %30 = vsyncadd [#allocation6], %s29
      %s31 = sshll.u32 [#allocation5], 4
      %s32 = int_to_ptr.vmem [resolvable:$true] %s31
      %37 = dma.hbm_to_vmem [thread:$0]  %s1, 1024, %s32, [#allocation6], 64, 64, 4
    $region9: #{tpu_custom_call.1} parent=1 // pred_fallthru
      _
    // Predicated region
    $region10: #{tpu_custom_call.1} parent=1 // pred_check
      _
    $region11: #{tpu_custom_call.1} parent=1 // pred_check_branch
      %39 = sbr.rel (0) target = $region13
    $region12: #{tpu_custom_call.1} parent=1 // pred_region
      _
    $region13: #{tpu_custom_call.1} parent=1 // pred_fallthru
      _
    // Predicated region
    $region14: #{tpu_custom_call.1} parent=1 // pred_check
      _
    $region15: #{tpu_custom_call.1} parent=1 // pred_check_branch
      %41 = sbr.rel (0) target = $region17
    $region16: #{tpu_custom_call.1} parent=1 // pred_region
      %s43 = ssub.s32 1024, 1024
      %44 = vsyncadd [#allocation6], %s43
      %s45 = sshll.u32 [#allocation7], 4
      %s46 = int_to_ptr.vmem [resolvable:$true] %s45
      %51 = dma.hbm_to_vmem [thread:$0]  %s3, 1024, %s46, [#allocation6], 64, 64, 4
    $region17: #{tpu_custom_call.1} parent=1 // pred_fallthru
      _
    // Predicated region
    $region18: #{tpu_custom_call.1} parent=1 // pred_check
      _
    $region19: #{tpu_custom_call.1} parent=1 // pred_check_branch
      %53 = sbr.rel (0) target = $region21
    $region20: #{tpu_custom_call.1} parent=1 // pred_region
      _
    $region21: #{tpu_custom_call.1} parent=1 // pred_fallthru
      _
    // Predicated region
    $region22: #{tpu_custom_call.1} parent=1 // pred_check
      _
    $region23: #{tpu_custom_call.1} parent=1 // pred_check_branch
      %55 = sbr.rel (0) target = $region25
    $region24: #{tpu_custom_call.1} parent=1 // pred_region
      %56 = dma.done [#allocation3], 128
    $region25: #{tpu_custom_call.1} parent=1 // pred_fallthru
      _
    // Predicated region
    $region26: #{tpu_custom_call.1} parent=1 // pred_check
      _
    $region27: #{tpu_custom_call.1} parent=1 // pred_check_branch
      %58 = sbr.rel (0) target = $region29
    $region28: #{tpu_custom_call.1} parent=1 // pred_region
      %59 = dma.done [#allocation6], 1024
    $region29: #{tpu_custom_call.1} parent=1 // pred_fallthru
      _
    // Predicated region
    $region30: #{tpu_custom_call.1} parent=1 // pred_check
      _
    $region31: #{tpu_custom_call.1} parent=1 // pred_check_branch
      %61 = sbr.rel (0) target = $region33
    $region32: #{tpu_custom_call.1} parent=1 // pred_region
      %62 = dma.done [#allocation6], 1024
    $region33: #{tpu_custom_call.1} parent=1 // pred_fallthru
      _
    %v64 = vld [vmem:[#allocation2] sm:$0xff]
    %v65 = vld [vmem:[#allocation5] sm:$0xf]
    %v66 = vld [vmem:[#allocation5 + $0x4] sm:$0xf]
    %v67 = vld [vmem:[#allocation5 + $0x8] sm:$0xf]
    %v68 = vld [vmem:[#allocation5 + $0xc] sm:$0xf]
    %v69 = vld [vmem:[#allocation5 + $0x10] sm:$0xf]
    %v70 = vld [vmem:[#allocation5 + $0x14] sm:$0xf]
    %v71 = vld [vmem:[#allocation5 + $0x18] sm:$0xf]
    %v72 = vld [vmem:[#allocation5 + $0x1c] sm:$0xf]
    %v73 = vld [vmem:[#allocation5 + $0x20] sm:$0xf]
    %v74 = vld [vmem:[#allocation5 + $0x24] sm:$0xf]
    %v75 = vld [vmem:[#allocation5 + $0x28] sm:$0xf]
    %v76 = vld [vmem:[#allocation5 + $0x2c] sm:$0xf]
    %v77 = vld [vmem:[#allocation5 + $0x30] sm:$0xf]
    %v78 = vld [vmem:[#allocation5 + $0x34] sm:$0xf]
    %v79 = vld [vmem:[#allocation5 + $0x38] sm:$0xf]
    %v80 = vld [vmem:[#allocation5 + $0x3c] sm:$0xf]
    %v81 = vld [vmem:[%s2] sm:$0x1]
    %v82 = vpack.c.bf16 %v64, %v64
    %v84 = vlaneseq
    %v85 = vshrl.u32 %v84, 7
    %v86 = vsub.s32 0, %v85
    %v87 = vrot.slane %v81, %v86
    %v105 = vunpack.c.l.b16 %v65
    %v106 = vunpack.c.l.b16 %v66
    %v107 = vunpack.c.l.b16 %v67
    %v108 = vunpack.c.l.b16 %v68
    %v109 = vunpack.c.l.b16 %v69
    %v110 = vunpack.c.l.b16 %v70
    %v111 = vunpack.c.l.b16 %v71
    %v112 = vunpack.c.l.b16 %v72
    %v113 = vunpack.c.l.b16 %v73
    %v114 = vunpack.c.l.b16 %v74
    %v115 = vunpack.c.l.b16 %v75
    %v116 = vunpack.c.l.b16 %v76
    %v117 = vunpack.c.l.b16 %v77
    %v118 = vunpack.c.l.b16 %v78
    %v119 = vunpack.c.l.b16 %v79
    %v120 = vunpack.c.l.b16 %v80
    %v121 = vpack.c.b16 %v106, %v105
    %v122 = vpack.c.b16 %v108, %v107
    %v123 = vpack.c.b16 %v110, %v109
    %v124 = vpack.c.b16 %v112, %v111
    %v125 = vpack.c.b16 %v114, %v113
    %v126 = vpack.c.b16 %v116, %v115
    %v127 = vpack.c.b16 %v118, %v117
    %v128 = vpack.c.b16 %v120, %v119
    %137 = vmatprep.subr.bf16.mxu0 0
    %138 = vmatpush1.bf16.msra.mxu0 %v121
    %139 = vmatprep.subr.bf16.mxu0 0
    %140 = vmatpush1.bf16.msra.mxu0 %v122
    %141 = vmatprep.subr.bf16.mxu0 0
    %142 = vmatpush1.bf16.msra.mxu0 %v123
    %143 = vmatprep.subr.bf16.mxu0 0
    %144 = vmatpush1.bf16.msra.mxu0 %v124
    %145 = vmatprep.subr.bf16.mxu0 0
    %146 = vmatpush1.bf16.msra.mxu0 %v125
    %147 = vmatprep.subr.bf16.mxu0 0
    %148 = vmatpush1.bf16.msra.mxu0 %v126
    %149 = vmatprep.subr.bf16.mxu0 0
    %150 = vmatpush1.bf16.msra.mxu0 %v127
    %151 = vmatprep.subr.bf16.mxu0 0
    %152 = vmatpush1.bf16.msra.mxu0 %v128
    %153 = vmatprep.subr.bf16.mxu0 0
    %154 = vmatpush1.bf16.msra.mxu0 0
    %155 = vmatprep.subr.bf16.mxu0 0
    %156 = vmatpush1.bf16.msra.mxu0 0
    %157 = vmatprep.subr.bf16.mxu0 0
    %158 = vmatpush1.bf16.msra.mxu0 0
    %159 = vmatprep.subr.bf16.mxu0 0
    %160 = vmatpush1.bf16.msra.mxu0 0
    %161 = vmatprep.subr.bf16.mxu0 0
    %162 = vmatpush1.bf16.msra.mxu0 0
    %163 = vmatprep.subr.bf16.mxu0 0
    %164 = vmatpush1.bf16.msra.mxu0 0
    %165 = vmatprep.subr.bf16.mxu0 0
    %166 = vmatpush1.bf16.msra.mxu0 0
    %167 = vmatprep.subr.bf16.mxu0 0
    %168 = vmatpush1.bf16.msra.mxu0 0
    %169 = vmatprep.mubr.bf16.mxu0 0
    %170 = vmatmul.mubr.bf16.gmra.mrb[0].mxu0 %v82
    %v171 = vpop.f32.mrb[0].mxu0
    %v172 = vadd.f32 %v87, %v171
    %v173 = vpop.f32.mrb[0].mxu0
    %v174 = vpop.f32.mrb[0].mxu0
    %v175 = vpop.f32.mrb[0].mxu0
    %176 = vdwg.mxu0
    %v177 = vxor.u32 %v172, 2147483648
    %v178 = vmul.f32 %v177, 1.442695
    %v179 = vpow.pop %v178
    %v180 = vadd.f32 %v179, 1.0
    %v181 = vrcp.pop %v180
    %v182 = vmul.f32 1.0, %v181
    %183 = vst [vmem:[#allocation9] sm:$0xff] %v182
    %v184 = vld [vmem:[#allocation7] sm:$0xf]
    %v185 = vld [vmem:[#allocation7 + $0x4] sm:$0xf]
    %v186 = vld [vmem:[#allocation7 + $0x8] sm:$0xf]
    %v187 = vld [vmem:[#allocation7 + $0xc] sm:$0xf]
    %v188 = vld [vmem:[#allocation7 + $0x10] sm:$0xf]
    %v189 = vld [vmem:[#allocation7 + $0x14] sm:$0xf]
    %v190 = vld [vmem:[#allocation7 + $0x18] sm:$0xf]
    %v191 = vld [vmem:[#allocation7 + $0x1c] sm:$0xf]
    %v192 = vld [vmem:[#allocation7 + $0x20] sm:$0xf]
    %v193 = vld [vmem:[#allocation7 + $0x24] sm:$0xf]
    %v194 = vld [vmem:[#allocation7 + $0x28] sm:$0xf]
    %v195 = vld [vmem:[#allocation7 + $0x2c] sm:$0xf]
    %v196 = vld [vmem:[#allocation7 + $0x30] sm:$0xf]
    %v197 = vld [vmem:[#allocation7 + $0x34] sm:$0xf]
    %v198 = vld [vmem:[#allocation7 + $0x38] sm:$0xf]
    %v199 = vld [vmem:[#allocation7 + $0x3c] sm:$0xf]
    %v200 = vld [vmem:[%s4] sm:$0x1]
    %v201 = vpack.c.bf16 %v182, %v182
    %v203 = vlaneseq
    %v204 = vshrl.u32 %v203, 7
    %v205 = vsub.s32 0, %v204
    %v206 = vrot.slane %v200, %v205
    %v224 = vunpack.c.l.b16 %v184
    %v225 = vunpack.c.l.b16 %v185
    %v226 = vunpack.c.l.b16 %v186
    %v227 = vunpack.c.l.b16 %v187
    %v228 = vunpack.c.l.b16 %v188
    %v229 = vunpack.c.l.b16 %v189
    %v230 = vunpack.c.l.b16 %v190
    %v231 = vunpack.c.l.b16 %v191
    %v232 = vunpack.c.l.b16 %v192
    %v233 = vunpack.c.l.b16 %v193
    %v234 = vunpack.c.l.b16 %v194
    %v235 = vunpack.c.l.b16 %v195
    %v236 = vunpack.c.l.b16 %v196
    %v237 = vunpack.c.l.b16 %v197
    %v238 = vunpack.c.l.b16 %v198
    %v239 = vunpack.c.l.b16 %v199
    %v240 = vpack.c.b16 %v225, %v224
    %v241 = vpack.c.b16 %v227, %v226
    %v242 = vpack.c.b16 %v229, %v228
    %v243 = vpack.c.b16 %v231, %v230
    %v244 = vpack.c.b16 %v233, %v232
    %v245 = vpack.c.b16 %v235, %v234
    %v246 = vpack.c.b16 %v237, %v236
    %v247 = vpack.c.b16 %v239, %v238
    %256 = vmatprep.subr.bf16.mxu0 0
    %257 = vmatpush1.bf16.msra.mxu0 %v240
    %258 = vmatprep.subr.bf16.mxu0 0
    %259 = vmatpush1.bf16.msra.mxu0 %v241
    %260 = vmatprep.subr.bf16.mxu0 0
    %261 = vmatpush1.bf16.msra.mxu0 %v242
    %262 = vmatprep.subr.bf16.mxu0 0
    %263 = vmatpush1.bf16.msra.mxu0 %v243
    %264 = vmatprep.subr.bf16.mxu0 0
    %265 = vmatpush1.bf16.msra.mxu0 %v244
    %266 = vmatprep.subr.bf16.mxu0 0
    %267 = vmatpush1.bf16.msra.mxu0 %v245
    %268 = vmatprep.subr.bf16.mxu0 0
    %269 = vmatpush1.bf16.msra.mxu0 %v246
    %270 = vmatprep.subr.bf16.mxu0 0
    %271 = vmatpush1.bf16.msra.mxu0 %v247
    %272 = vmatprep.subr.bf16.mxu0 0
    %273 = vmatpush1.bf16.msra.mxu0 0
    %274 = vmatprep.subr.bf16.mxu0 0
    %275 = vmatpush1.bf16.msra.mxu0 0
    %276 = vmatprep.subr.bf16.mxu0 0
    %277 = vmatpush1.bf16.msra.mxu0 0
    %278 = vmatprep.subr.bf16.mxu0 0
    %279 = vmatpush1.bf16.msra.mxu0 0
    %280 = vmatprep.subr.bf16.mxu0 0
    %281 = vmatpush1.bf16.msra.mxu0 0
    %282 = vmatprep.subr.bf16.mxu0 0
    %283 = vmatpush1.bf16.msra.mxu0 0
    %284 = vmatprep.subr.bf16.mxu0 0
    %285 = vmatpush1.bf16.msra.mxu0 0
    %286 = vmatprep.subr.bf16.mxu0 0
    %287 = vmatpush1.bf16.msra.mxu0 0
    %288 = vmatprep.mubr.bf16.mxu0 0
    %289 = vmatmul.mubr.bf16.gmra.mrb[0].mxu0 %v201
    %v290 = vpop.f32.mrb[0].mxu0
    %v291 = vadd.f32 %v206, %v290
    %v292 = vpop.f32.mrb[0].mxu0
    %v293 = vpop.f32.mrb[0].mxu0
    %v294 = vpop.f32.mrb[0].mxu0
    %295 = vdwg.mxu0
    %296 = vst [vmem:[#allocation8] sm:$0xff] %v291
    // Predicated region
    $region34: #{tpu_custom_call.1} parent=1 // pred_check
      _
    $region35: #{tpu_custom_call.1} parent=1 // pred_check_branch
      %298 = sbr.rel (0) target = $region37
    $region36: #{tpu_custom_call.1} parent=1 // pred_region
      %s300 = ssub.s32 128, 128
      %301 = vsyncadd [#allocation4], %s300
      %s303 = sshll.u32 [#allocation8], 4
      %s304 = int_to_ptr.vmem [resolvable:$true] %s303
      %306 = dma.vmem_to_hbm [thread:$0]  %s304, 128, %s5, [#allocation4]
    $region37: #{tpu_custom_call.1} parent=1 // pred_fallthru
      _
    // Predicated region
    $region38: #{tpu_custom_call.1} parent=1 // pred_check
      _
    $region39: #{tpu_custom_call.1} parent=1 // pred_check_branch
      %308 = sbr.rel (0) target = $region41
    $region40: #{tpu_custom_call.1} parent=1 // pred_region
      %s310 = ssub.s32 128, 128
      %311 = vsyncadd [#allocation10], %s310
      %s313 = sshll.u32 [#allocation9], 4
      %s314 = int_to_ptr.vmem [resolvable:$true] %s313
      %316 = dma.vmem_to_hbm [thread:$0]  %s314, 128, %s6, [#allocation10]
    $region41: #{tpu_custom_call.1} parent=1 // pred_fallthru
      _
    // Predicated region
    $region42: #{tpu_custom_call.1} parent=1 // pred_check
      _
    $region43: #{tpu_custom_call.1} parent=1 // pred_check_branch
      %318 = sbr.rel (0) target = $region45
    $region44: #{tpu_custom_call.1} parent=1 // pred_region
      %319 = dma.done [#allocation4], 128
    $region45: #{tpu_custom_call.1} parent=1 // pred_fallthru
      _
    // Predicated region
    $region46: #{tpu_custom_call.1} parent=1 // pred_check
      _
    $region47: #{tpu_custom_call.1} parent=1 // pred_check_branch
      %321 = sbr.rel (0) target = $region49
    $region48: #{tpu_custom_call.1} parent=1 // pred_region
      %322 = dma.done [#allocation10], 128
    $region49: #{tpu_custom_call.1} parent=1 // pred_fallthru
      _
    %323 = vsyncpa [#allocation3], 1
    %324 = vsyncpa [#allocation6], 1
    %325 = vsyncpa [#allocation4], 1
    %326 = vsyncpa [#allocation10], 1

// kernel: tpu_custom_call.1
$region0: #{tpu_custom_call.1}
  #allocation0 [shape = 'u32[]', space=smem, size = 0x4, offset = 0x4, fixed_abs, tag = 'smem constant byte address 0x4 - core index']
  #allocation1 [shape = 'u32[144,128]{1,0:T(1,128)}', space=vmem, size = 0x12000, scoped, tag = 'internal scratch']
  %s0 = inlined_call_operand.hbm [shape: f32[8,128], index: 0, kind: input, shape index: {}]
  %s1 = inlined_call_operand.hbm [shape: bf16[128,128], index: 1, kind: input, shape index: {}]
  %s2 = inlined_call_operand.vmem [shape: f32[1,128], index: 2, kind: input, shape index: {}]
  %s3 = inlined_call_operand.hbm [shape: bf16[128,128], index: 3, kind: input, shape index: {}]
  %s4 = inlined_call_operand.vmem [shape: f32[1,128], index: 4, kind: input, shape index: {}]
  %s5 = inlined_call_operand.hbm [shape: f32[8,128], index: 5, kind: output, shape index: {0}]
  %s6 = inlined_call_operand.hbm [shape: f32[8,128], index: 6, kind: output, shape index: {1}]
  %7 = xla_tuple %s5, %s6
  %s8 = sld [smem:[#allocation0]]
  $region50: #{tpu_custom_call.1} parent=0
    _
  %s10 = ssub.s32 1, %s8
  %s11 = scalar_select 0, %s10, %s8
  $region1: #{tpu_custom_call.1} parent=0
    #allocation2 [shape = 'u8[4096]{0}', space=vmem, size = 0x1000, scoped, tag = 'input window, operand 0, single buffered']
    #allocation3 [shape = 's32[1]{0}', space=sflag, size = 0x4, scoped, tag = 'scoped memory for tpu_custom_call.1']
    #allocation4 [shape = 's32[1]{0}', space=sflag, size = 0x4, scoped, tag = 'scoped memory for tpu_custom_call.1']
    #allocation5 [shape = 'u8[32768]{0}', space=vmem, size = 0x8000, scoped, tag = 'input window, operand 1, single buffered']
    #allocation6 [shape = 's32[1]{0}', space=sflag, size = 0x4, scoped, tag = 'scoped memory for tpu_custom_call.1']
    #allocation7 [shape = 'u8[32768]{0}', space=vmem, size = 0x8000, scoped, tag = 'input window, operand 3, single buffered']
    #allocation8 [shape = 'u8[4096]{0}', space=vmem, size = 0x1000, scoped, tag = 'output window, operand 0, single buffered']
    #allocation9 [shape = 'u8[4096]{0}', space=vmem, size = 0x1000, scoped, tag = 'output window, operand 1, single buffered']
    #allocation10 [shape = 's32[1]{0}', space=sflag, size = 0x4, scoped, tag = 'scoped memory for tpu_custom_call.1']
    %12 = vsyncpa [#allocation3], 0
    %13 = vsyncpa [#allocation6], 0
    %14 = vsyncpa [#allocation4], 0
    %15 = vsyncpa [#allocation10], 0
    // Predicated region
    $region2: #{tpu_custom_call.1} parent=1 // pred_check
      _
    $region3: #{tpu_custom_call.1} parent=1 // pred_check_branch
      %17 = sbr.rel (0) target = $region5
    $region4: #{tpu_custom_call.1} parent=1 // pred_region
      %s19 = ssub.s32 128, 128
      %20 = vsyncadd [#allocation3], %s19
      %s22 = sshll.u32 [#allocation2], 4
      %s23 = int_to_ptr.vmem [resolvable:$true] %s22
      %25 = dma.hbm_to_vmem [thread:$0]  %s0, 128, %s23, [#allocation3]
    $region5: #{tpu_custom_call.1} parent=1 // pred_fallthru
      _
    // Predicated region
    $region6: #{tpu_custom_call.1} parent=1 // pred_check
      _
    $region7: #{tpu_custom_call.1} parent=1 // pred_check_branch
      %27 = sbr.rel (0) target = $region9
    $region8: #{tpu_custom_call.1} parent=1 // pred_region
      %s29 = ssub.s32 1024, 1024
      %30 = vsyncadd [#allocation6], %s29
      %s31 = sshll.u32 [#allocation5], 4
      %s32 = int_to_ptr.vmem [resolvable:$true] %s31
      %37 = dma.hbm_to_vmem [thread:$0]  %s1, 1024, %s32, [#allocation6], 64, 64, 4
    $region9: #{tpu_custom_call.1} parent=1 // pred_fallthru
      _
    // Predicated region
    $region10: #{tpu_custom_call.1} parent=1 // pred_check
      _
    $region11: #{tpu_custom_call.1} parent=1 // pred_check_branch
      %39 = sbr.rel (0) target = $region13
    $region12: #{tpu_custom_call.1} parent=1 // pred_region
      _
    $region13: #{tpu_custom_call.1} parent=1 // pred_fallthru
      _
    // Predicated region
    $region14: #{tpu_custom_call.1} parent=1 // pred_check
      _
    $region15: #{tpu_custom_call.1} parent=1 // pred_check_branch
      %41 = sbr.rel (0) target = $region17
    $region16: #{tpu_custom_call.1} parent=1 // pred_region
      %s43 = ssub.s32 1024, 1024
      %44 = vsyncadd [#allocation6], %s43
      %s45 = sshll.u32 [#allocation7], 4
      %s46 = int_to_ptr.vmem [resolvable:$true] %s45
      %51 = dma.hbm_to_vmem [thread:$0]  %s3, 1024, %s46, [#allocation6], 64, 64, 4
    $region17: #{tpu_custom_call.1} parent=1 // pred_fallthru
      _
    // Predicated region
    $region18: #{tpu_custom_call.1} parent=1 // pred_check
      _
    $region19: #{tpu_custom_call.1} parent=1 // pred_check_branch
      %53 = sbr.rel (0) target = $region21
    $region20: #{tpu_custom_call.1} parent=1 // pred_region
      _
    $region21: #{tpu_custom_call.1} parent=1 // pred_fallthru
      _
    // Predicated region
    $region22: #{tpu_custom_call.1} parent=1 // pred_check
      _
    $region23: #{tpu_custom_call.1} parent=1 // pred_check_branch
      %55 = sbr.rel (0) target = $region25
    $region24: #{tpu_custom_call.1} parent=1 // pred_region
      %56 = dma.done [#allocation3], 128
    $region25: #{tpu_custom_call.1} parent=1 // pred_fallthru
      _
    // Predicated region
    $region26: #{tpu_custom_call.1} parent=1 // pred_check
      _
    $region27: #{tpu_custom_call.1} parent=1 // pred_check_branch
      %58 = sbr.rel (0) target = $region29
    $region28: #{tpu_custom_call.1} parent=1 // pred_region
      %59 = dma.done [#allocation6], 1024
    $region29: #{tpu_custom_call.1} parent=1 // pred_fallthru
      _
    // Predicated region
    $region30: #{tpu_custom_call.1} parent=1 // pred_check
      _
    $region31: #{tpu_custom_call.1} parent=1 // pred_check_branch
      %61 = sbr.rel (0) target = $region33
    $region32: #{tpu_custom_call.1} parent=1 // pred_region
      %62 = dma.done [#allocation6], 1024
    $region33: #{tpu_custom_call.1} parent=1 // pred_fallthru
      _
    %v64 = vld [vmem:[#allocation2] sm:$0xff]
    %v65 = vld [vmem:[#allocation5] sm:$0xf]
    %v66 = vld [vmem:[#allocation5 + $0x4] sm:$0xf]
    %v67 = vld [vmem:[#allocation5 + $0x8] sm:$0xf]
    %v68 = vld [vmem:[#allocation5 + $0xc] sm:$0xf]
    %v69 = vld [vmem:[#allocation5 + $0x10] sm:$0xf]
    %v70 = vld [vmem:[#allocation5 + $0x14] sm:$0xf]
    %v71 = vld [vmem:[#allocation5 + $0x18] sm:$0xf]
    %v72 = vld [vmem:[#allocation5 + $0x1c] sm:$0xf]
    %v73 = vld [vmem:[#allocation5 + $0x20] sm:$0xf]
    %v74 = vld [vmem:[#allocation5 + $0x24] sm:$0xf]
    %v75 = vld [vmem:[#allocation5 + $0x28] sm:$0xf]
    %v76 = vld [vmem:[#allocation5 + $0x2c] sm:$0xf]
    %v77 = vld [vmem:[#allocation5 + $0x30] sm:$0xf]
    %v78 = vld [vmem:[#allocation5 + $0x34] sm:$0xf]
    %v79 = vld [vmem:[#allocation5 + $0x38] sm:$0xf]
    %v80 = vld [vmem:[#allocation5 + $0x3c] sm:$0xf]
    %v81 = vld [vmem:[%s2] sm:$0x1]
    %v82 = vpack.c.bf16 %v64, %v64
    %v84 = vlaneseq
    %v85 = vshrl.u32 %v84, 7
    %v86 = vsub.s32 0, %v85
    %v87 = vrot.slane %v81, %v86
    %v105 = vunpack.c.l.b16 %v65
    %v106 = vunpack.c.l.b16 %v66
    %v107 = vunpack.c.l.b16 %v67
    %v108 = vunpack.c.l.b16 %v68
    %v109 = vunpack.c.l.b16 %v69
    %v110 = vunpack.c.l.b16 %v70
    %v111 = vunpack.c.l.b16 %v71
    %v112 = vunpack.c.l.b16 %v72
    %v113 = vunpack.c.l.b16 %v73
    %v114 = vunpack.c.l.b16 %v74
    %v115 = vunpack.c.l.b16 %v75
    %v116 = vunpack.c.l.b16 %v76
    %v117 = vunpack.c.l.b16 %v77
    %v118 = vunpack.c.l.b16 %v78
    %v119 = vunpack.c.l.b16 %v79
    %v120 = vunpack.c.l.b16 %v80
    %v121 = vpack.c.b16 %v106, %v105
    %v122 = vpack.c.b16 %v108, %v107
    %v123 = vpack.c.b16 %v110, %v109
    %v124 = vpack.c.b16 %v112, %v111
    %v125 = vpack.c.b16 %v114, %v113
    %v126 = vpack.c.b16 %v116, %v115
    %v127 = vpack.c.b16 %v118, %v117
    %v128 = vpack.c.b16 %v120, %v119
    %137 = vmatprep.subr.bf16.mxu0 0
    %138 = vmatpush1.bf16.msra.mxu0 %v121
    %139 = vmatprep.subr.bf16.mxu0 0
    %140 = vmatpush1.bf16.msra.mxu0 %v122
    %141 = vmatprep.subr.bf16.mxu0 0
    %142 = vmatpush1.bf16.msra.mxu0 %v123
    %143 = vmatprep.subr.bf16.mxu0 0
    %144 = vmatpush1.bf16.msra.mxu0 %v124
    %145 = vmatprep.subr.bf16.mxu0 0
    %146 = vmatpush1.bf16.msra.mxu0 %v125
    %147 = vmatprep.subr.bf16.mxu0 0
    %148 = vmatpush1.bf16.msra.mxu0 %v126
    %149 = vmatprep.subr.bf16.mxu0 0
    %150 = vmatpush1.bf16.msra.mxu0 %v127
    %151 = vmatprep.subr.bf16.mxu0 0
    %152 = vmatpush1.bf16.msra.mxu0 %v128
    %153 = vmatprep.subr.bf16.mxu0 0
    %154 = vmatpush1.bf16.msra.mxu0 0
    %155 = vmatprep.subr.bf16.mxu0 0
    %156 = vmatpush1.bf16.msra.mxu0 0
    %157 = vmatprep.subr.bf16.mxu0 0
    %158 = vmatpush1.bf16.msra.mxu0 0
    %159 = vmatprep.subr.bf16.mxu0 0
    %160 = vmatpush1.bf16.msra.mxu0 0
    %161 = vmatprep.subr.bf16.mxu0 0
    %162 = vmatpush1.bf16.msra.mxu0 0
    %163 = vmatprep.subr.bf16.mxu0 0
    %164 = vmatpush1.bf16.msra.mxu0 0
    %165 = vmatprep.subr.bf16.mxu0 0
    %166 = vmatpush1.bf16.msra.mxu0 0
    %167 = vmatprep.subr.bf16.mxu0 0
    %168 = vmatpush1.bf16.msra.mxu0 0
    %169 = vmatprep.mubr.bf16.mxu0 0
    %170 = vmatmul.mubr.bf16.gmra.mrb[0].mxu0 %v82
    %v171 = vpop.f32.mrb[0].mxu0
    %v172 = vadd.f32 %v87, %v171
    %v173 = vpop.f32.mrb[0].mxu0
    %v174 = vpop.f32.mrb[0].mxu0
    %v175 = vpop.f32.mrb[0].mxu0
    %176 = vdwg.mxu0
    %v177 = vxor.u32 %v172, 2147483648
    %v178 = vmul.f32 %v177, 1.442695
    %v179 = vpow.pop %v178
    %v180 = vadd.f32 %v179, 1.0
    %v181 = vrcp.pop %v180
    %v182 = vmul.f32 1.0, %v181
    %183 = vst [vmem:[#allocation9] sm:$0xff] %v182
    %v184 = vld [vmem:[#allocation7] sm:$0xf]
    %v185 = vld [vmem:[#allocation7 + $0x4] sm:$0xf]
    %v186 = vld [vmem:[#allocation7 + $0x8] sm:$0xf]
    %v187 = vld [vmem:[#allocation7 + $0xc] sm:$0xf]
    %v188 = vld [vmem:[#allocation7 + $0x10] sm:$0xf]
    %v189 = vld [vmem:[#allocation7 + $0x14] sm:$0xf]
    %v190 = vld [vmem:[#allocation7 + $0x18] sm:$0xf]
    %v191 = vld [vmem:[#allocation7 + $0x1c] sm:$0xf]
    %v192 = vld [vmem:[#allocation7 + $0x20] sm:$0xf]
    %v193 = vld [vmem:[#allocation7 + $0x24] sm:$0xf]
    %v194 = vld [vmem:[#allocation7 + $0x28] sm:$0xf]
    %v195 = vld [vmem:[#allocation7 + $0x2c] sm:$0xf]
    %v196 = vld [vmem:[#allocation7 + $0x30] sm:$0xf]
    %v197 = vld [vmem:[#allocation7 + $0x34] sm:$0xf]
    %v198 = vld [vmem:[#allocation7 + $0x38] sm:$0xf]
    %v199 = vld [vmem:[#allocation7 + $0x3c] sm:$0xf]
    %v200 = vld [vmem:[%s4] sm:$0x1]
    %v201 = vpack.c.bf16 %v182, %v182
    %v203 = vlaneseq
    %v204 = vshrl.u32 %v203, 7
    %v205 = vsub.s32 0, %v204
    %v206 = vrot.slane %v200, %v205
    %v224 = vunpack.c.l.b16 %v184
    %v225 = vunpack.c.l.b16 %v185
    %v226 = vunpack.c.l.b16 %v186
    %v227 = vunpack.c.l.b16 %v187
    %v228 = vunpack.c.l.b16 %v188
    %v229 = vunpack.c.l.b16 %v189
    %v230 = vunpack.c.l.b16 %v190
    %v231 = vunpack.c.l.b16 %v191
    %v232 = vunpack.c.l.b16 %v192
    %v233 = vunpack.c.l.b16 %v193
    %v234 = vunpack.c.l.b16 %v194
    %v235 = vunpack.c.l.b16 %v195
    %v236 = vunpack.c.l.b16 %v196
    %v237 = vunpack.c.l.b16 %v197
    %v238 = vunpack.c.l.b16 %v198
    %v239 = vunpack.c.l.b16 %v199
    %v240 = vpack.c.b16 %v225, %v224
    %v241 = vpack.c.b16 %v227, %v226
    %v242 = vpack.c.b16 %v229, %v228
    %v243 = vpack.c.b16 %v231, %v230
    %v244 = vpack.c.b16 %v233, %v232
    %v245 = vpack.c.b16 %v235, %v234
    %v246 = vpack.c.b16 %v237, %v236
    %v247 = vpack.c.b16 %v239, %v238
    %256 = vmatprep.subr.bf16.mxu0 0
    %257 = vmatpush1.bf16.msra.mxu0 %v240
    %258 = vmatprep.subr.bf16.mxu0 0
    %259 = vmatpush1.bf16.msra.mxu0 %v241
    %260 = vmatprep.subr.bf16.mxu0 0
    %261 = vmatpush1.bf16.msra.mxu0 %v242
    %262 = vmatprep.subr.bf16.mxu0 0
    %263 = vmatpush1.bf16.msra.mxu0 %v243
    %264 = vmatprep.subr.bf16.mxu0 0
    %265 = vmatpush1.bf16.msra.mxu0 %v244
    %266 = vmatprep.subr.bf16.mxu0 0
    %267 = vmatpush1.bf16.msra.mxu0 %v245
    %268 = vmatprep.subr.bf16.mxu0 0
    %269 = vmatpush1.bf16.msra.mxu0 %v246
    %270 = vmatprep.subr.bf16.mxu0 0
    %271 = vmatpush1.bf16.msra.mxu0 %v247
    %272 = vmatprep.subr.bf16.mxu0 0
    %273 = vmatpush1.bf16.msra.mxu0 0
    %274 = vmatprep.subr.bf16.mxu0 0
    %275 = vmatpush1.bf16.msra.mxu0 0
    %276 = vmatprep.subr.bf16.mxu0 0
    %277 = vmatpush1.bf16.msra.mxu0 0
    %278 = vmatprep.subr.bf16.mxu0 0
    %279 = vmatpush1.bf16.msra.mxu0 0
    %280 = vmatprep.subr.bf16.mxu0 0
    %281 = vmatpush1.bf16.msra.mxu0 0
    %282 = vmatprep.subr.bf16.mxu0 0
    %283 = vmatpush1.bf16.msra.mxu0 0
    %284 = vmatprep.subr.bf16.mxu0 0
    %285 = vmatpush1.bf16.msra.mxu0 0
    %286 = vmatprep.subr.bf16.mxu0 0
    %287 = vmatpush1.bf16.msra.mxu0 0
    %288 = vmatprep.mubr.bf16.mxu0 0
    %289 = vmatmul.mubr.bf16.gmra.mrb[0].mxu0 %v201
    %v290 = vpop.f32.mrb[0].mxu0
    %v291 = vadd.f32 %v206, %v290
    %v292 = vpop.f32.mrb[0].mxu0
    %v293 = vpop.f32.mrb[0].mxu0
    %v294 = vpop.f32.mrb[0].mxu0
    %295 = vdwg.mxu0
    %296 = vst [vmem:[#allocation8] sm:$0xff] %v291
    // Predicated region
    $region34: #{tpu_custom_call.1} parent=1 // pred_check
      _
    $region35: #{tpu_custom_call.1} parent=1 // pred_check_branch
      %298 = sbr.rel (0) target = $region37
    $region36: #{tpu_custom_call.1} parent=1 // pred_region
      %s300 = ssub.s32 128, 128
      %301 = vsyncadd [#allocation4], %s300
      %s303 = sshll.u32 [#allocation8], 4
      %s304 = int_to_ptr.vmem [resolvable:$true] %s303
      %306 = dma.vmem_to_hbm [thread:$0]  %s304, 128, %s5, [#allocation4]
    $region37: #{tpu_custom_call.1} parent=1 // pred_fallthru
      _
    // Predicated region
    $region38: #{tpu_custom_call.1} parent=1 // pred_check
      _
    $region39: #{tpu_custom_call.1} parent=1 // pred_check_branch
      %308 = sbr.rel (0) target = $region41
    $region40: #{tpu_custom_call.1} parent=1 // pred_region
      %s310 = ssub.s32 128, 128
      %311 = vsyncadd [#allocation10], %s310
      %s313 = sshll.u32 [#allocation9], 4
      %s314 = int_to_ptr.vmem [resolvable:$true] %s313
      %316 = dma.vmem_to_hbm [thread:$0]  %s314, 128, %s6, [#allocation10]
    $region41: #{tpu_custom_call.1} parent=1 // pred_fallthru
      _
    // Predicated region
    $region42: #{tpu_custom_call.1} parent=1 // pred_check
      _
    $region43: #{tpu_custom_call.1} parent=1 // pred_check_branch
      %318 = sbr.rel (0) target = $region45
    $region44: #{tpu_custom_call.1} parent=1 // pred_region
      %319 = dma.done [#allocation4], 128
    $region45: #{tpu_custom_call.1} parent=1 // pred_fallthru
      _
    // Predicated region
    $region46: #{tpu_custom_call.1} parent=1 // pred_check
      _
    $region47: #{tpu_custom_call.1} parent=1 // pred_check_branch
      %321 = sbr.rel (0) target = $region49
    $region48: #{tpu_custom_call.1} parent=1 // pred_region
      %322 = dma.done [#allocation10], 128
    $region49: #{tpu_custom_call.1} parent=1 // pred_fallthru
      _
    %323 = vsyncpa [#allocation3], 1
    %324 = vsyncpa [#allocation6], 1
    %325 = vsyncpa [#allocation4], 1
    %326 = vsyncpa [#allocation10], 1

</llo_original>
